<compile_context>
chip_gen: v7x
topology: tpu7x:2x2x1
jax: 0.10.0
libtpu: 0.0.40
codegen_flags: <defaults>
</compile_context>

<pallas_src>
import functools

import jax
import jax.numpy as jnp
from jax.experimental import pallas as pl
from jax.experimental.pallas import tpu as pltpu


def _round_up(n, m):
    return pl.cdiv(n, m) * m


def gaussian_encoder_kernel(x_ref, w1_ref, b1_ref, w2_ref, b2_ref,
                            w3_ref, b3_ref, out_ref, *, latent_dim):
    # x_ref: (TB, D) f32 tile of the flattened input batch.
    # Cast to bf16 in-body (no separate wrapper cast pass over HBM).
    x = x_ref[...].astype(jnp.bfloat16)

    # Layer 1: bf16 operands, f32 accumulation on the MXU; bias/ReLU in f32
    # (v5e VPU/EUP have no bf16 path, so f32 elementwise is the right split).
    h1 = jnp.dot(x, w1_ref[...], preferred_element_type=jnp.float32) + b1_ref[...]
    h1 = jnp.maximum(h1, 0.0).astype(jnp.bfloat16)

    # Layer 2.
    h2 = jnp.dot(h1, w2_ref[...], preferred_element_type=jnp.float32) + b2_ref[...]
    h2 = jnp.maximum(h2, 0.0).astype(jnp.bfloat16)

    # Layer 3 (outputs 2M logits, lane-padded to a multiple of 128).
    o = jnp.dot(h2, w3_ref[...], preferred_element_type=jnp.float32) + b3_ref[...]

    # One lane-dense store: cols [0, M) = mean, cols [M, 2M) = exp(std).
    # NOTE: exp() is evaluated on the mean/pad columns too (cheap EUP filler,
    # avoids a cross-lane slice); it may overflow to +inf in those discarded
    # lanes — harmless, jnp.where selects element-wise and no NaN is produced.
    col = jax.lax.broadcasted_iota(jnp.int32, o.shape, 1)
    out_ref[...] = jnp.where(col < latent_dim, o, jnp.exp(o)).astype(out_ref.dtype)


def prepare_params(params):
    """One-time parameter prep (hoisted out of the per-call hot path):
    bf16 weights, f32 biases, W3/b3 zero-padded to a lane-dense width."""
    w1, b1, w2, b2, w3, b3 = params
    M2 = w3.shape[1]
    N = _round_up(M2, 128)               # lane-dense output width
    w3p = jnp.pad(w3, ((0, 0), (0, N - M2)))
    b3p = jnp.pad(b3, ((0, 0), (0, N - M2)))
    prepped = (w1.astype(jnp.bfloat16), b1.astype(jnp.float32),
               w2.astype(jnp.bfloat16), b2.astype(jnp.float32),
               w3p.astype(jnp.bfloat16), b3p.astype(jnp.float32))
    return jax.tree_util.tree_map(jax.block_until_ready, prepped), M2 // 2


def gaussian_encoder(x, prepared_params, latent_dim, *, tb=None):
    """Returns (mean, scale) of the Independent Normal latent distribution."""
    B, F1, F2 = x.shape
    D = F1 * F2
    w1b, b1f, w2b, b2f, w3b, b3f = prepared_params
    H = w1b.shape[1]
    M = latent_dim
    M2 = 2 * M
    N = w3b.shape[1]                      # lane-dense (multiple of 128)

    # Batch tile: target 1024 rows (amortizes ~0.35 us/step pipeline cost),
    # 16-row aligned for bf16 sublane packing, capped by the 16-padded batch.
    if tb is None:
        tb = 1024
    Bp16 = _round_up(B, 16)
    tb = max(16, min(_round_up(tb, 16), Bp16))
    # v7x megacore: keep >= 2 grid steps once the batch is big enough so the
    # "parallel" batch axis can shard across both TensorCores (no-op v5e/v6e).
    if Bp16 >= 512 and tb > Bp16 // 2:
        tb = max(256, _round_up(Bp16 // 2, 16))
    Bp = _round_up(B, tb)                 # pad batch instead of asserting

    xf = x.reshape(B, D)                  # == nn.Flatten (row-major); stays f32
    if Bp != B:
        xf = jnp.pad(xf, ((0, Bp - B), (0, 0)))

    grid = (Bp // tb,)

    flops = 2 * Bp * (D * H + H * H + H * N) + Bp * (2 * H + N)
    transcendentals = Bp * N
    bytes_accessed = (Bp * D * 4                       # x (f32, cast in-body)
                      + (D * H + H * H + H * N) * 2    # weights (bf16)
                      + (2 * H + N) * 4                # biases (f32)
                      + Bp * N * 2)                    # output (bf16)

    kernel = functools.partial(gaussian_encoder_kernel, latent_dim=M)

    out = pl.pallas_call(
        kernel,
        out_shape=jax.ShapeDtypeStruct((Bp, N), jnp.bfloat16),
        grid_spec=pltpu.PrefetchScalarGridSpec(
            num_scalar_prefetch=0,
            grid=grid,
            in_specs=[
                pl.BlockSpec((tb, D), lambda i: (i, 0)),   # x tile over batch
                # Constant-indexed weights/biases: DMA'd once, stay resident.
                pl.BlockSpec((D, H), lambda i: (0, 0)),    # W1
                pl.BlockSpec((1, H), lambda i: (0, 0)),    # b1
                pl.BlockSpec((H, H), lambda i: (0, 0)),    # W2
                pl.BlockSpec((1, H), lambda i: (0, 0)),    # b2
                pl.BlockSpec((H, N), lambda i: (0, 0)),    # W3 (lane-padded)
                pl.BlockSpec((1, N), lambda i: (0, 0)),    # b3 (lane-padded)
            ],
            out_specs=pl.BlockSpec((tb, N), lambda i: (i, 0)),
        ),
        compiler_params=pltpu.CompilerParams(
            dimension_semantics=("parallel",)),   # shards batch across v7x TCs
        cost_estimate=pl.CostEstimate(
            flops=flops, transcendentals=transcendentals,
            bytes_accessed=bytes_accessed),
    )(xf, w1b, b1f, w2b, b2f, w3b, b3f)

    # torch.chunk(o, 2, dim=-1): free layout plumbing in the wrapper.
    # Upcast the bf16 kernel output for f32 callers.
    mean = out[:B, :M].astype(jnp.float32)
    scale = out[:B, M:M2].astype(jnp.float32)
    return mean, scale


def init_params(key, D, H, M):
    """Deterministic synthetic parameters (shapes follow the encoder_net MLP)."""
    k1, k2, k3, k4, k5, k6 = jax.random.split(key, 6)
    s = 0.05
    w1 = s * jax.random.normal(k1, (D, H), jnp.float32)
    b1 = s * jax.random.normal(k2, (1, H), jnp.float32)
    w2 = s * jax.random.normal(k3, (H, H), jnp.float32)
    b2 = s * jax.random.normal(k4, (1, H), jnp.float32)
    w3 = s * jax.random.normal(k5, (H, 2 * M), jnp.float32)
    b3 = s * jax.random.normal(k6, (1, 2 * M), jnp.float32)
    return (w1, b1, w2, b2, w3, b3)


def reference(x, params):
    """Pure-JAX f32 reference of the PyTorch forward semantics."""
    w1, b1, w2, b2, w3, b3 = params
    B = x.shape[0]
    xf = x.reshape(B, -1)
    h1 = jnp.maximum(xf @ w1 + b1, 0.0)
    h2 = jnp.maximum(h1 @ w2 + b2, 0.0)
    o = h2 @ w3 + b3
    mean, std = jnp.split(o, 2, axis=-1)
    return mean, jnp.exp(std)


if __name__ == "__main__":
    key = jax.random.PRNGKey(0)
    kx, kp = jax.random.split(key)

    B, F1, F2 = 16, 16, 16        # (batch, feature_dim1, feature_dim2)
    H = 128                       # hidden width
    M = 32                        # latent dim (encoder_net outputs 2M)

    x = jax.random.normal(kx, (B, F1, F2), jnp.float32)
    params = init_params(kp, F1 * F2, H, M)

    # One-time param prep (bf16 casts + lane padding) hoisted off the hot path.
    prepped, latent_dim = prepare_params(params)

    mean, scale = gaussian_encoder(x, prepped, latent_dim)
    jax.block_until_ready((mean, scale))

    ref_mean, ref_scale = reference(x, params)
    assert mean.shape == (B, M) and scale.shape == (B, M)
    # bf16 MXU operands + bf16 output (f32 accumulation) loosen numerics vs
    # the f32 reference; 2e-2 tolerances absorb it.
    assert jnp.allclose(mean, ref_mean, atol=2e-2, rtol=2e-2)
    assert jnp.allclose(scale, ref_scale, atol=2e-2, rtol=2e-2)

    # TODO(synk): td.Independent(td.Normal(...)) is a distribution object, not
    # a tensor op; the kernel returns its parameters (mean, scale).
    print("KERNEL_OK")
</pallas_src>

<mosaic_0001>
module attributes {stable_mosaic.version = 11 : i64} {
  func.func @gaussian_encoder_kernel(%arg0: i32, %arg1: memref<16x256xf32, #tpu.memory_space<vmem>>, %arg2: memref<256x128xbf16, #tpu.memory_space<vmem>>, %arg3: memref<1x128xf32, #tpu.memory_space<vmem>>, %arg4: memref<128x128xbf16, #tpu.memory_space<vmem>>, %arg5: memref<1x128xf32, #tpu.memory_space<vmem>>, %arg6: memref<128x128xbf16, #tpu.memory_space<vmem>>, %arg7: memref<1x128xf32, #tpu.memory_space<vmem>>, %arg8: memref<16x128xbf16, #tpu.memory_space<vmem>>) attributes {dimension_semantics = [#tpu.dimension_semantics<parallel>], iteration_bounds = array<i64: 1>, scalar_prefetch = 0 : i64, scratch_operands = 0 : i64, tpu.core_type = #tpu.core_type<tc>, window_params = [{transform_indices = @transform_0, window_bounds = array<i64: 16, 256>}, {pipeline_mode = #tpu.pipeline_mode<synchronous>, transform_indices = @transform_1, window_bounds = array<i64: 256, 128>}, {pipeline_mode = #tpu.pipeline_mode<synchronous>, transform_indices = @transform_2, window_bounds = array<i64: 1, 128>}, {pipeline_mode = #tpu.pipeline_mode<synchronous>, transform_indices = @transform_3, window_bounds = array<i64: 128, 128>}, {pipeline_mode = #tpu.pipeline_mode<synchronous>, transform_indices = @transform_4, window_bounds = array<i64: 1, 128>}, {pipeline_mode = #tpu.pipeline_mode<synchronous>, transform_indices = @transform_5, window_bounds = array<i64: 128, 128>}, {pipeline_mode = #tpu.pipeline_mode<synchronous>, transform_indices = @transform_6, window_bounds = array<i64: 1, 128>}, {transform_indices = @transform_7, window_bounds = array<i64: 16, 128>}]} {
    %c0 = arith.constant 0 : index
    %c0_0 = arith.constant 0 : index
    %0 = vector.load %arg1[%c0, %c0_0] : memref<16x256xf32, #tpu.memory_space<vmem>>, vector<16x256xf32>
    %1 = arith.truncf %0 : vector<16x256xf32> to vector<16x256xbf16>
    %c0_1 = arith.constant 0 : index
    %c0_2 = arith.constant 0 : index
    %2 = vector.load %arg2[%c0_1, %c0_2] : memref<256x128xbf16, #tpu.memory_space<vmem>>, vector<256x128xbf16>
    %cst = arith.constant dense<0.000000e+00> : vector<16x128xf32>
    %3 = tpu.matmul %1, %2, %cst {dimension_numbers = #tpu.dot_dimension_numbers<[1], [0], [0], [1], [0, 0, 1, 1], [], []>} : vector<16x256xbf16>, vector<256x128xbf16>, vector<16x128xf32> -> vector<16x128xf32>
    %c0_3 = arith.constant 0 : index
    %c0_4 = arith.constant 0 : index
    %4 = vector.load %arg3[%c0_3, %c0_4] : memref<1x128xf32, #tpu.memory_space<vmem>>, vector<1x128xf32>
    %5 = vector.broadcast %4 : vector<1x128xf32> to vector<16x128xf32>
    %6 = arith.addf %3, %5 : vector<16x128xf32>
    %cst_5 = arith.constant 0.000000e+00 : f32
    %7 = vector.broadcast %cst_5 : f32 to vector<16x128xf32>
    %8 = arith.maximumf %6, %7 : vector<16x128xf32>
    %9 = arith.truncf %8 : vector<16x128xf32> to vector<16x128xbf16>
    %c0_6 = arith.constant 0 : index
    %c0_7 = arith.constant 0 : index
    %10 = vector.load %arg4[%c0_6, %c0_7] : memref<128x128xbf16, #tpu.memory_space<vmem>>, vector<128x128xbf16>
    %cst_8 = arith.constant dense<0.000000e+00> : vector<16x128xf32>
    %11 = tpu.matmul %9, %10, %cst_8 {dimension_numbers = #tpu.dot_dimension_numbers<[1], [0], [0], [1], [0, 0, 1, 1], [], []>} : vector<16x128xbf16>, vector<128x128xbf16>, vector<16x128xf32> -> vector<16x128xf32>
    %c0_9 = arith.constant 0 : index
    %c0_10 = arith.constant 0 : index
    %12 = vector.load %arg5[%c0_9, %c0_10] : memref<1x128xf32, #tpu.memory_space<vmem>>, vector<1x128xf32>
    %13 = vector.broadcast %12 : vector<1x128xf32> to vector<16x128xf32>
    %14 = arith.addf %11, %13 : vector<16x128xf32>
    %cst_11 = arith.constant 0.000000e+00 : f32
    %15 = vector.broadcast %cst_11 : f32 to vector<16x128xf32>
    %16 = arith.maximumf %14, %15 : vector<16x128xf32>
    %17 = arith.truncf %16 : vector<16x128xf32> to vector<16x128xbf16>
    %c0_12 = arith.constant 0 : index
    %c0_13 = arith.constant 0 : index
    %18 = vector.load %arg6[%c0_12, %c0_13] : memref<128x128xbf16, #tpu.memory_space<vmem>>, vector<128x128xbf16>
    %cst_14 = arith.constant dense<0.000000e+00> : vector<16x128xf32>
    %19 = tpu.matmul %17, %18, %cst_14 {dimension_numbers = #tpu.dot_dimension_numbers<[1], [0], [0], [1], [0, 0, 1, 1], [], []>} : vector<16x128xbf16>, vector<128x128xbf16>, vector<16x128xf32> -> vector<16x128xf32>
    %c0_15 = arith.constant 0 : index
    %c0_16 = arith.constant 0 : index
    %20 = vector.load %arg7[%c0_15, %c0_16] : memref<1x128xf32, #tpu.memory_space<vmem>>, vector<1x128xf32>
    %21 = vector.broadcast %20 : vector<1x128xf32> to vector<16x128xf32>
    %22 = arith.addf %19, %21 : vector<16x128xf32>
    %23 = tpu.iota {dimensions = array<i32: 1>} : vector<16x128xi32>
    %c32_i32 = arith.constant 32 : i32
    %24 = vector.broadcast %c32_i32 : i32 to vector<16x128xi32>
    %25 = arith.cmpi slt, %23, %24 : vector<16x128xi32>
    %26 = math.exp %22 : vector<16x128xf32>
    %27 = arith.select %25, %22, %26 : vector<16x128xi1>, vector<16x128xf32>
    %28 = arith.truncf %27 : vector<16x128xf32> to vector<16x128xbf16>
    %c0_17 = arith.constant 0 : index
    %c0_18 = arith.constant 0 : index
    %29 = vector.load %arg8[%c0_17, %c0_18] : memref<16x128xbf16, #tpu.memory_space<vmem>>, vector<16x128xbf16>
    tpu.vector_store %arg8[%c0_17, %c0_18], %28 {strides = array<i32>} : memref<16x128xbf16, #tpu.memory_space<vmem>>, vector<16x128xbf16>,
    return
  }
  func.func @transform_0(%arg0: i32) -> (i32, i32) {
    %c0_i32 = arith.constant 0 : i32
    %c0_i32_0 = arith.constant 0 : i32
    return %arg0, %c0_i32 : i32, i32
  }
  func.func @transform_1(%arg0: i32) -> (i32, i32) {
    %c0_i32 = arith.constant 0 : i32
    %c0_i32_0 = arith.constant 0 : i32
    %c0_i32_1 = arith.constant 0 : i32
    return %c0_i32, %c0_i32_0 : i32, i32
  }
  func.func @transform_2(%arg0: i32) -> (i32, i32) {
    %c0_i32 = arith.constant 0 : i32
    %c0_i32_0 = arith.constant 0 : i32
    %c0_i32_1 = arith.constant 0 : i32
    return %c0_i32, %c0_i32_0 : i32, i32
  }
  func.func @transform_3(%arg0: i32) -> (i32, i32) {
    %c0_i32 = arith.constant 0 : i32
    %c0_i32_0 = arith.constant 0 : i32
    %c0_i32_1 = arith.constant 0 : i32
    return %c0_i32, %c0_i32_0 : i32, i32
  }
  func.func @transform_4(%arg0: i32) -> (i32, i32) {
    %c0_i32 = arith.constant 0 : i32
    %c0_i32_0 = arith.constant 0 : i32
    %c0_i32_1 = arith.constant 0 : i32
    return %c0_i32, %c0_i32_0 : i32, i32
  }
  func.func @transform_5(%arg0: i32) -> (i32, i32) {
    %c0_i32 = arith.constant 0 : i32
    %c0_i32_0 = arith.constant 0 : i32
    %c0_i32_1 = arith.constant 0 : i32
    return %c0_i32, %c0_i32_0 : i32, i32
  }
  func.func @transform_6(%arg0: i32) -> (i32, i32) {
    %c0_i32 = arith.constant 0 : i32
    %c0_i32_0 = arith.constant 0 : i32
    %c0_i32_1 = arith.constant 0 : i32
    return %c0_i32, %c0_i32_0 : i32, i32
  }
  func.func @transform_7(%arg0: i32) -> (i32, i32) {
    %c0_i32 = arith.constant 0 : i32
    %c0_i32_0 = arith.constant 0 : i32
    return %arg0, %c0_i32 : i32, i32
  }
}

</mosaic_0001>

<llo_original>
// kernel: tpu_custom_call.1
$region0: #{tpu_custom_call.1}
  #allocation0 [shape = 'u32[]', space=smem, size = 0x4, offset = 0x4, fixed_abs, tag = 'smem constant byte address 0x4 - core index']
  #allocation1 [shape = 'u32[144,128]{1,0:T(1,128)}', space=vmem, size = 0x12000, scoped, tag = 'internal scratch']
  %s0 = inlined_call_operand.hbm [shape: f32[16,256], index: 0, kind: input, shape index: {}]
  %s1 = inlined_call_operand.hbm [shape: bf16[256,128], index: 1, kind: input, shape index: {}]
  %s2 = inlined_call_operand.vmem [shape: f32[1,128], index: 2, kind: input, shape index: {}]
  %s3 = inlined_call_operand.hbm [shape: bf16[128,128], index: 3, kind: input, shape index: {}]
  %s4 = inlined_call_operand.vmem [shape: f32[1,128], index: 4, kind: input, shape index: {}]
  %s5 = inlined_call_operand.hbm [shape: bf16[128,128], index: 5, kind: input, shape index: {}]
  %s6 = inlined_call_operand.vmem [shape: f32[1,128], index: 6, kind: input, shape index: {}]
  %s7 = inlined_call_operand.hbm [shape: bf16[16,128], index: 7, kind: output, shape index: {}]
  %s8 = sld [smem:[#allocation0]]
  $region54: #{tpu_custom_call.1} parent=0
    _
  %s10 = ssub.s32 1, %s8
  %s11 = scalar_select 0, %s10, %s8
  $region1: #{tpu_custom_call.1} parent=0
    #allocation2 [shape = 'u8[16384]{0}', space=vmem, size = 0x4000, scoped, tag = 'input window, operand 0, single buffered']
    #allocation3 [shape = 's32[1]{0}', space=sflag, size = 0x4, scoped, tag = 'scoped memory for tpu_custom_call.1']
    #allocation4 [shape = 's32[1]{0}', space=sflag, size = 0x4, scoped, tag = 'scoped memory for tpu_custom_call.1']
    #allocation5 [shape = 'u8[65536]{0}', space=vmem, size = 0x10000, scoped, tag = 'input window, operand 1, single buffered']
    #allocation6 [shape = 's32[1]{0}', space=sflag, size = 0x4, scoped, tag = 'scoped memory for tpu_custom_call.1']
    #allocation7 [shape = 'u8[32768]{0}', space=vmem, size = 0x8000, scoped, tag = 'input window, operand 3, single buffered']
    #allocation8 [shape = 'u8[32768]{0}', space=vmem, size = 0x8000, scoped, tag = 'input window, operand 5, single buffered']
    #allocation9 [shape = 's32[1]{0}', space=sflag, size = 0x4, scoped, tag = 'scoped memory for tpu_custom_call.1']
    #allocation10 [shape = 'u8[4096]{0}', space=vmem, size = 0x1000, scoped, tag = 'output window, operand 0, single buffered']
    %12 = vsyncpa [#allocation3], 0
    %13 = vsyncpa [#allocation6], 0
    %14 = vsyncpa [#allocation9], 0
    %15 = vsyncpa [#allocation4], 0
    // Predicated region
    $region2: #{tpu_custom_call.1} parent=1 // pred_check
      _
    $region3: #{tpu_custom_call.1} parent=1 // pred_check_branch
      %17 = sbr.rel (0) target = $region5
    $region4: #{tpu_custom_call.1} parent=1 // pred_region
      %s19 = ssub.s32 512, 512
      %20 = vsyncadd [#allocation3], %s19
      %s21 = sshll.u32 [#allocation2], 4
      %s22 = int_to_ptr.vmem [resolvable:$true] %s21
      %27 = dma.hbm_to_vmem [thread:$0]  %s0, 512, %s22, [#allocation3], 256, 256, 16
    $region5: #{tpu_custom_call.1} parent=1 // pred_fallthru
      _
    // Predicated region
    $region6: #{tpu_custom_call.1} parent=1 // pred_check
      _
    $region7: #{tpu_custom_call.1} parent=1 // pred_check_branch
      %29 = sbr.rel (0) target = $region9
    $region8: #{tpu_custom_call.1} parent=1 // pred_region
      %s31 = ssub.s32 2048, 2048
      %32 = vsyncadd [#allocation6], %s31
      %s33 = sshll.u32 [#allocation5], 4
      %s34 = int_to_ptr.vmem [resolvable:$true] %s33
      %39 = dma.hbm_to_vmem [thread:$0]  %s1, 2048, %s34, [#allocation6], 64, 64, 4
    $region9: #{tpu_custom_call.1} parent=1 // pred_fallthru
      _
    // Predicated region
    $region10: #{tpu_custom_call.1} parent=1 // pred_check
      _
    $region11: #{tpu_custom_call.1} parent=1 // pred_check_branch
      %41 = sbr.rel (0) target = $region13
    $region12: #{tpu_custom_call.1} parent=1 // pred_region
      _
    $region13: #{tpu_custom_call.1} parent=1 // pred_fallthru
      _
    // Predicated region
    $region14: #{tpu_custom_call.1} parent=1 // pred_check
      _
    $region15: #{tpu_custom_call.1} parent=1 // pred_check_branch
      %43 = sbr.rel (0) target = $region17
    $region16: #{tpu_custom_call.1} parent=1 // pred_region
      %s45 = ssub.s32 1024, 1024
      %46 = vsyncadd [#allocation6], %s45
      %s47 = sshll.u32 [#allocation7], 4
      %s48 = int_to_ptr.vmem [resolvable:$true] %s47
      %53 = dma.hbm_to_vmem [thread:$0]  %s3, 1024, %s48, [#allocation6], 64, 64, 4
    $region17: #{tpu_custom_call.1} parent=1 // pred_fallthru
      _
    // Predicated region
    $region18: #{tpu_custom_call.1} parent=1 // pred_check
      _
    $region19: #{tpu_custom_call.1} parent=1 // pred_check_branch
      %55 = sbr.rel (0) target = $region21
    $region20: #{tpu_custom_call.1} parent=1 // pred_region
      _
    $region21: #{tpu_custom_call.1} parent=1 // pred_fallthru
      _
    // Predicated region
    $region22: #{tpu_custom_call.1} parent=1 // pred_check
      _
    $region23: #{tpu_custom_call.1} parent=1 // pred_check_branch
      %57 = sbr.rel (0) target = $region25
    $region24: #{tpu_custom_call.1} parent=1 // pred_region
      %s59 = ssub.s32 1024, 1024
      %60 = vsyncadd [#allocation9], %s59
      %s61 = sshll.u32 [#allocation8], 4
      %s62 = int_to_ptr.vmem [resolvable:$true] %s61
      %67 = dma.hbm_to_vmem [thread:$0]  %s5, 1024, %s62, [#allocation9], 64, 64, 4
    $region25: #{tpu_custom_call.1} parent=1 // pred_fallthru
      _
    // Predicated region
    $region26: #{tpu_custom_call.1} parent=1 // pred_check
      _
    $region27: #{tpu_custom_call.1} parent=1 // pred_check_branch
      %69 = sbr.rel (0) target = $region29
    $region28: #{tpu_custom_call.1} parent=1 // pred_region
      _
    $region29: #{tpu_custom_call.1} parent=1 // pred_fallthru
      _
    // Predicated region
    $region30: #{tpu_custom_call.1} parent=1 // pred_check
      _
    $region31: #{tpu_custom_call.1} parent=1 // pred_check_branch
      %71 = sbr.rel (0) target = $region33
    $region32: #{tpu_custom_call.1} parent=1 // pred_region
      %72 = dma.done [#allocation3], 512
    $region33: #{tpu_custom_call.1} parent=1 // pred_fallthru
      _
    // Predicated region
    $region34: #{tpu_custom_call.1} parent=1 // pred_check
      _
    $region35: #{tpu_custom_call.1} parent=1 // pred_check_branch
      %74 = sbr.rel (0) target = $region37
    $region36: #{tpu_custom_call.1} parent=1 // pred_region
      %75 = dma.done [#allocation6], 2048
    $region37: #{tpu_custom_call.1} parent=1 // pred_fallthru
      _
    // Predicated region
    $region38: #{tpu_custom_call.1} parent=1 // pred_check
      _
    $region39: #{tpu_custom_call.1} parent=1 // pred_check_branch
      %77 = sbr.rel (0) target = $region41
    $region40: #{tpu_custom_call.1} parent=1 // pred_region
      %78 = dma.done [#allocation6], 1024
    $region41: #{tpu_custom_call.1} parent=1 // pred_fallthru
      _
    // Predicated region
    $region42: #{tpu_custom_call.1} parent=1 // pred_check
      _
    $region43: #{tpu_custom_call.1} parent=1 // pred_check_branch
      %80 = sbr.rel (0) target = $region45
    $region44: #{tpu_custom_call.1} parent=1 // pred_region
      %81 = dma.done [#allocation9], 1024
    $region45: #{tpu_custom_call.1} parent=1 // pred_fallthru
      _
    %v83 = vld [vmem:[#allocation2] sm:$0xff]
    %v84 = vld [vmem:[#allocation2 + $0x8] sm:$0xff]
    %v85 = vld [vmem:[#allocation2 + $0x10] sm:$0xff]
    %v86 = vld [vmem:[#allocation2 + $0x18] sm:$0xff]
    %v87 = vpack.c.bf16 %v85, %v83
    %v88 = vpack.c.bf16 %v86, %v84
    %v89 = vld [vmem:[#allocation5] sm:$0xf]
    %v90 = vld [vmem:[#allocation5 + $0x4] sm:$0xf]
    %v91 = vld [vmem:[#allocation5 + $0x8] sm:$0xf]
    %v92 = vld [vmem:[#allocation5 + $0xc] sm:$0xf]
    %v93 = vld [vmem:[#allocation5 + $0x10] sm:$0xf]
    %v94 = vld [vmem:[#allocation5 + $0x14] sm:$0xf]
    %v95 = vld [vmem:[#allocation5 + $0x18] sm:$0xf]
    %v96 = vld [vmem:[#allocation5 + $0x1c] sm:$0xf]
    %v97 = vld [vmem:[#allocation5 + $0x20] sm:$0xf]
    %v98 = vld [vmem:[#allocation5 + $0x24] sm:$0xf]
    %v99 = vld [vmem:[#allocation5 + $0x28] sm:$0xf]
    %v100 = vld [vmem:[#allocation5 + $0x2c] sm:$0xf]
    %v101 = vld [vmem:[#allocation5 + $0x30] sm:$0xf]
    %v102 = vld [vmem:[#allocation5 + $0x34] sm:$0xf]
    %v103 = vld [vmem:[#allocation5 + $0x38] sm:$0xf]
    %v104 = vld [vmem:[#allocation5 + $0x3c] sm:$0xf]
    %v105 = vld [vmem:[#allocation5 + $0x40] sm:$0xf]
    %v106 = vld [vmem:[#allocation5 + $0x44] sm:$0xf]
    %v107 = vld [vmem:[#allocation5 + $0x48] sm:$0xf]
    %v108 = vld [vmem:[#allocation5 + $0x4c] sm:$0xf]
    %v109 = vld [vmem:[#allocation5 + $0x50] sm:$0xf]
    %v110 = vld [vmem:[#allocation5 + $0x54] sm:$0xf]
    %v111 = vld [vmem:[#allocation5 + $0x58] sm:$0xf]
    %v112 = vld [vmem:[#allocation5 + $0x5c] sm:$0xf]
    %v113 = vld [vmem:[#allocation5 + $0x60] sm:$0xf]
    %v114 = vld [vmem:[#allocation5 + $0x64] sm:$0xf]
    %v115 = vld [vmem:[#allocation5 + $0x68] sm:$0xf]
    %v116 = vld [vmem:[#allocation5 + $0x6c] sm:$0xf]
    %v117 = vld [vmem:[#allocation5 + $0x70] sm:$0xf]
    %v118 = vld [vmem:[#allocation5 + $0x74] sm:$0xf]
    %v119 = vld [vmem:[#allocation5 + $0x78] sm:$0xf]
    %v120 = vld [vmem:[#allocation5 + $0x7c] sm:$0xf]
    %v121 = vld [vmem:[%s2] sm:$0x1]
    %v123 = vlaneseq
    %v124 = vshrl.u32 %v123, 7
    %v125 = vsub.s32 0, %v124
    %v126 = vrot.slane %v121, %v125
    %v160 = vunpack.c.l.b16 %v89
    %v161 = vunpack.c.l.b16 %v90
    %v162 = vunpack.c.l.b16 %v91
    %v163 = vunpack.c.l.b16 %v92
    %v164 = vunpack.c.l.b16 %v93
    %v165 = vunpack.c.l.b16 %v94
    %v166 = vunpack.c.l.b16 %v95
    %v167 = vunpack.c.l.b16 %v96
    %v168 = vunpack.c.l.b16 %v97
    %v169 = vunpack.c.l.b16 %v98
    %v170 = vunpack.c.l.b16 %v99
    %v171 = vunpack.c.l.b16 %v100
    %v172 = vunpack.c.l.b16 %v101
    %v173 = vunpack.c.l.b16 %v102
    %v174 = vunpack.c.l.b16 %v103
    %v175 = vunpack.c.l.b16 %v104
    %v176 = vunpack.c.l.b16 %v105
    %v177 = vunpack.c.l.b16 %v106
    %v178 = vunpack.c.l.b16 %v107
    %v179 = vunpack.c.l.b16 %v108
    %v180 = vunpack.c.l.b16 %v109
    %v181 = vunpack.c.l.b16 %v110
    %v182 = vunpack.c.l.b16 %v111
    %v183 = vunpack.c.l.b16 %v112
    %v184 = vunpack.c.l.b16 %v113
    %v185 = vunpack.c.l.b16 %v114
    %v186 = vunpack.c.l.b16 %v115
    %v187 = vunpack.c.l.b16 %v116
    %v188 = vunpack.c.l.b16 %v117
    %v189 = vunpack.c.l.b16 %v118
    %v190 = vunpack.c.l.b16 %v119
    %v191 = vunpack.c.l.b16 %v120
    %v192 = vpack.c.b16 %v161, %v160
    %v193 = vpack.c.b16 %v163, %v162
    %v194 = vpack.c.b16 %v165, %v164
    %v195 = vpack.c.b16 %v167, %v166
    %v196 = vpack.c.b16 %v169, %v168
    %v197 = vpack.c.b16 %v171, %v170
    %v198 = vpack.c.b16 %v173, %v172
    %v199 = vpack.c.b16 %v175, %v174
    %v200 = vpack.c.b16 %v177, %v176
    %v201 = vpack.c.b16 %v179, %v178
    %v202 = vpack.c.b16 %v181, %v180
    %v203 = vpack.c.b16 %v183, %v182
    %v204 = vpack.c.b16 %v185, %v184
    %v205 = vpack.c.b16 %v187, %v186
    %v206 = vpack.c.b16 %v189, %v188
    %v207 = vpack.c.b16 %v191, %v190
    %224 = vmatprep.subr.bf16.mxu0 0
    %225 = vmatpush1.bf16.msra.mxu0 %v192
    %226 = vmatprep.subr.bf16.mxu0 0
    %227 = vmatpush1.bf16.msra.mxu0 %v193
    %228 = vmatprep.subr.bf16.mxu0 0
    %229 = vmatpush1.bf16.msra.mxu0 %v194
    %230 = vmatprep.subr.bf16.mxu0 0
    %231 = vmatpush1.bf16.msra.mxu0 %v195
    %232 = vmatprep.subr.bf16.mxu0 0
    %233 = vmatpush1.bf16.msra.mxu0 %v196
    %234 = vmatprep.subr.bf16.mxu0 0
    %235 = vmatpush1.bf16.msra.mxu0 %v197
    %236 = vmatprep.subr.bf16.mxu0 0
    %237 = vmatpush1.bf16.msra.mxu0 %v198
    %238 = vmatprep.subr.bf16.mxu0 0
    %239 = vmatpush1.bf16.msra.mxu0 %v199
    %240 = vmatprep.subr.bf16.mxu0 0
    %241 = vmatpush1.bf16.msra.mxu0 %v200
    %242 = vmatprep.subr.bf16.mxu0 0
    %243 = vmatpush1.bf16.msra.mxu0 %v201
    %244 = vmatprep.subr.bf16.mxu0 0
    %245 = vmatpush1.bf16.msra.mxu0 %v202
    %246 = vmatprep.subr.bf16.mxu0 0
    %247 = vmatpush1.bf16.msra.mxu0 %v203
    %248 = vmatprep.subr.bf16.mxu0 0
    %249 = vmatpush1.bf16.msra.mxu0 %v204
    %250 = vmatprep.subr.bf16.mxu0 0
    %251 = vmatpush1.bf16.msra.mxu0 %v205
    %252 = vmatprep.subr.bf16.mxu0 0
    %253 = vmatpush1.bf16.msra.mxu0 %v206
    %254 = vmatprep.subr.bf16.mxu0 0
    %255 = vmatpush1.bf16.msra.mxu0 %v207
    %256 = vmatprep.mubr.bf16.mxu0 %v88
    %257 = vmatmul.mubr.bf16.gmra.mrb[0].mxu0 %v87
    %v258 = vpop.f32.mrb[0].mxu0
    %v259 = vadd.f32 %v126, %v258
    %v260 = vpop.f32.mrb[0].mxu0
    %v261 = vpop.f32.mrb[0].mxu0
    %v262 = vadd.f32 %v126, %v261
    %v263 = vpop.f32.mrb[0].mxu0
    %264 = vdwg.mxu0
    %v265 = vmax.f32 %v259, 0.0
    %v266 = vmax.f32 %v262, 0.0
    %v267 = vpack.c.bf16 %v266, %v265
    %v268 = vld [vmem:[#allocation7] sm:$0xf]
    %v269 = vld [vmem:[#allocation7 + $0x4] sm:$0xf]
    %v270 = vld [vmem:[#allocation7 + $0x8] sm:$0xf]
    %v271 = vld [vmem:[#allocation7 + $0xc] sm:$0xf]
    %v272 = vld [vmem:[#allocation7 + $0x10] sm:$0xf]
    %v273 = vld [vmem:[#allocation7 + $0x14] sm:$0xf]
    %v274 = vld [vmem:[#allocation7 + $0x18] sm:$0xf]
    %v275 = vld [vmem:[#allocation7 + $0x1c] sm:$0xf]
    %v276 = vld [vmem:[#allocation7 + $0x20] sm:$0xf]
    %v277 = vld [vmem:[#allocation7 + $0x24] sm:$0xf]
    %v278 = vld [vmem:[#allocation7 + $0x28] sm:$0xf]
    %v279 = vld [vmem:[#allocation7 + $0x2c] sm:$0xf]
    %v280 = vld [vmem:[#allocation7 + $0x30] sm:$0xf]
    %v281 = vld [vmem:[#allocation7 + $0x34] sm:$0xf]
    %v282 = vld [vmem:[#allocation7 + $0x38] sm:$0xf]
    %v283 = vld [vmem:[#allocation7 + $0x3c] sm:$0xf]
    %v284 = vld [vmem:[%s4] sm:$0x1]
    %v286 = vlaneseq
    %v287 = vshrl.u32 %v286, 7
    %v288 = vsub.s32 0, %v287
    %v289 = vrot.slane %v284, %v288
    %v307 = vunpack.c.l.b16 %v268
    %v308 = vunpack.c.l.b16 %v269
    %v309 = vunpack.c.l.b16 %v270
    %v310 = vunpack.c.l.b16 %v271
    %v311 = vunpack.c.l.b16 %v272
    %v312 = vunpack.c.l.b16 %v273
    %v313 = vunpack.c.l.b16 %v274
    %v314 = vunpack.c.l.b16 %v275
    %v315 = vunpack.c.l.b16 %v276
    %v316 = vunpack.c.l.b16 %v277
    %v317 = vunpack.c.l.b16 %v278
    %v318 = vunpack.c.l.b16 %v279
    %v319 = vunpack.c.l.b16 %v280
    %v320 = vunpack.c.l.b16 %v281
    %v321 = vunpack.c.l.b16 %v282
    %v322 = vunpack.c.l.b16 %v283
    %v323 = vpack.c.b16 %v308, %v307
    %v324 = vpack.c.b16 %v310, %v309
    %v325 = vpack.c.b16 %v312, %v311
    %v326 = vpack.c.b16 %v314, %v313
    %v327 = vpack.c.b16 %v316, %v315
    %v328 = vpack.c.b16 %v318, %v317
    %v329 = vpack.c.b16 %v320, %v319
    %v330 = vpack.c.b16 %v322, %v321
    %339 = vmatprep.subr.bf16.mxu0 0
    %340 = vmatpush1.bf16.msra.mxu0 %v323
    %341 = vmatprep.subr.bf16.mxu0 0
    %342 = vmatpush1.bf16.msra.mxu0 %v324
    %343 = vmatprep.subr.bf16.mxu0 0
    %344 = vmatpush1.bf16.msra.mxu0 %v325
    %345 = vmatprep.subr.bf16.mxu0 0
    %346 = vmatpush1.bf16.msra.mxu0 %v326
    %347 = vmatprep.subr.bf16.mxu0 0
    %348 = vmatpush1.bf16.msra.mxu0 %v327
    %349 = vmatprep.subr.bf16.mxu0 0
    %350 = vmatpush1.bf16.msra.mxu0 %v328
    %351 = vmatprep.subr.bf16.mxu0 0
    %352 = vmatpush1.bf16.msra.mxu0 %v329
    %353 = vmatprep.subr.bf16.mxu0 0
    %354 = vmatpush1.bf16.msra.mxu0 %v330
    %355 = vmatprep.subr.bf16.mxu0 0
    %356 = vmatpush1.bf16.msra.mxu0 0
    %357 = vmatprep.subr.bf16.mxu0 0
    %358 = vmatpush1.bf16.msra.mxu0 0
    %359 = vmatprep.subr.bf16.mxu0 0
    %360 = vmatpush1.bf16.msra.mxu0 0
    %361 = vmatprep.subr.bf16.mxu0 0
    %362 = vmatpush1.bf16.msra.mxu0 0
    %363 = vmatprep.subr.bf16.mxu0 0
    %364 = vmatpush1.bf16.msra.mxu0 0
    %365 = vmatprep.subr.bf16.mxu0 0
    %366 = vmatpush1.bf16.msra.mxu0 0
    %367 = vmatprep.subr.bf16.mxu0 0
    %368 = vmatpush1.bf16.msra.mxu0 0
    %369 = vmatprep.subr.bf16.mxu0 0
    %370 = vmatpush1.bf16.msra.mxu0 0
    %371 = vmatprep.mubr.bf16.mxu0 0
    %372 = vmatmul.mubr.bf16.gmra.mrb[0].mxu0 %v267
    %v373 = vpop.f32.mrb[0].mxu0
    %v374 = vadd.f32 %v289, %v373
    %v375 = vpop.f32.mrb[0].mxu0
    %v376 = vpop.f32.mrb[0].mxu0
    %v377 = vadd.f32 %v289, %v376
    %v378 = vpop.f32.mrb[0].mxu0
    %379 = vdwg.mxu0
    %v380 = vmax.f32 %v374, 0.0
    %v381 = vmax.f32 %v377, 0.0
    %v382 = vpack.c.bf16 %v381, %v380
    %v383 = vld [vmem:[#allocation8] sm:$0xf]
    %v384 = vld [vmem:[#allocation8 + $0x4] sm:$0xf]
    %v385 = vld [vmem:[#allocation8 + $0x8] sm:$0xf]
    %v386 = vld [vmem:[#allocation8 + $0xc] sm:$0xf]
    %v387 = vld [vmem:[#allocation8 + $0x10] sm:$0xf]
    %v388 = vld [vmem:[#allocation8 + $0x14] sm:$0xf]
    %v389 = vld [vmem:[#allocation8 + $0x18] sm:$0xf]
    %v390 = vld [vmem:[#allocation8 + $0x1c] sm:$0xf]
    %v391 = vld [vmem:[#allocation8 + $0x20] sm:$0xf]
    %v392 = vld [vmem:[#allocation8 + $0x24] sm:$0xf]
    %v393 = vld [vmem:[#allocation8 + $0x28] sm:$0xf]
    %v394 = vld [vmem:[#allocation8 + $0x2c] sm:$0xf]
    %v395 = vld [vmem:[#allocation8 + $0x30] sm:$0xf]
    %v396 = vld [vmem:[#allocation8 + $0x34] sm:$0xf]
    %v397 = vld [vmem:[#allocation8 + $0x38] sm:$0xf]
    %v398 = vld [vmem:[#allocation8 + $0x3c] sm:$0xf]
    %v399 = vld [vmem:[%s6] sm:$0x1]
    %v401 = vlaneseq
    %v402 = vshrl.u32 %v401, 7
    %v403 = vsub.s32 0, %v402
    %v404 = vrot.slane %v399, %v403
    %v422 = vunpack.c.l.b16 %v383
    %v423 = vunpack.c.l.b16 %v384
    %v424 = vunpack.c.l.b16 %v385
    %v425 = vunpack.c.l.b16 %v386
    %v426 = vunpack.c.l.b16 %v387
    %v427 = vunpack.c.l.b16 %v388
    %v428 = vunpack.c.l.b16 %v389
    %v429 = vunpack.c.l.b16 %v390
    %v430 = vunpack.c.l.b16 %v391
    %v431 = vunpack.c.l.b16 %v392
    %v432 = vunpack.c.l.b16 %v393
    %v433 = vunpack.c.l.b16 %v394
    %v434 = vunpack.c.l.b16 %v395
    %v435 = vunpack.c.l.b16 %v396
    %v436 = vunpack.c.l.b16 %v397
    %v437 = vunpack.c.l.b16 %v398
    %v438 = vpack.c.b16 %v423, %v422
    %v439 = vpack.c.b16 %v425, %v424
    %v440 = vpack.c.b16 %v427, %v426
    %v441 = vpack.c.b16 %v429, %v428
    %v442 = vpack.c.b16 %v431, %v430
    %v443 = vpack.c.b16 %v433, %v432
    %v444 = vpack.c.b16 %v435, %v434
    %v445 = vpack.c.b16 %v437, %v436
    %454 = vmatprep.subr.bf16.mxu0 0
    %455 = vmatpush1.bf16.msra.mxu0 %v438
    %456 = vmatprep.subr.bf16.mxu0 0
    %457 = vmatpush1.bf16.msra.mxu0 %v439
    %458 = vmatprep.subr.bf16.mxu0 0
    %459 = vmatpush1.bf16.msra.mxu0 %v440
    %460 = vmatprep.subr.bf16.mxu0 0
    %461 = vmatpush1.bf16.msra.mxu0 %v441
    %462 = vmatprep.subr.bf16.mxu0 0
    %463 = vmatpush1.bf16.msra.mxu0 %v442
    %464 = vmatprep.subr.bf16.mxu0 0
    %465 = vmatpush1.bf16.msra.mxu0 %v443
    %466 = vmatprep.subr.bf16.mxu0 0
    %467 = vmatpush1.bf16.msra.mxu0 %v444
    %468 = vmatprep.subr.bf16.mxu0 0
    %469 = vmatpush1.bf16.msra.mxu0 %v445
    %470 = vmatprep.subr.bf16.mxu0 0
    %471 = vmatpush1.bf16.msra.mxu0 0
    %472 = vmatprep.subr.bf16.mxu0 0
    %473 = vmatpush1.bf16.msra.mxu0 0
    %474 = vmatprep.subr.bf16.mxu0 0
    %475 = vmatpush1.bf16.msra.mxu0 0
    %476 = vmatprep.subr.bf16.mxu0 0
    %477 = vmatpush1.bf16.msra.mxu0 0
    %478 = vmatprep.subr.bf16.mxu0 0
    %479 = vmatpush1.bf16.msra.mxu0 0
    %480 = vmatprep.subr.bf16.mxu0 0
    %481 = vmatpush1.bf16.msra.mxu0 0
    %482 = vmatprep.subr.bf16.mxu0 0
    %483 = vmatpush1.bf16.msra.mxu0 0
    %484 = vmatprep.subr.bf16.mxu0 0
    %485 = vmatpush1.bf16.msra.mxu0 0
    %486 = vmatprep.mubr.bf16.mxu0 0
    %487 = vmatmul.mubr.bf16.gmra.mrb[0].mxu0 %v382
    %v488 = vpop.f32.mrb[0].mxu0
    %v489 = vadd.f32 %v404, %v488
    %v490 = vpop.f32.mrb[0].mxu0
    %v491 = vpop.f32.mrb[0].mxu0
    %v492 = vadd.f32 %v404, %v491
    %v493 = vpop.f32.mrb[0].mxu0
    %494 = vdwg.mxu0
    %v495 = vlaneseq
    %v496 = vand.u32 %v495, 127
    %vm497 = vcmp.lt.s32.totalorder %v496, 32
    %v498 = vmul.f32 %v489, 1.442695
    %v499 = vpow.pop %v498
    %v500 = vmul.f32 %v492, 1.442695
    %v501 = vpow.pop %v500
    %v502 = vsel %vm497, %v489, %v499
    %v503 = vsel %vm497, %v492, %v501
    %v504 = vpack.c.bf16 %v503, %v502
    %v506 = vunpack.c.l.b16 %v504
    %v507 = vunpack.c.h.b16 %v504
    %v508 = vpack.c.b16 %v506, %v506
    %v509 = vpack.c.b16 %v507, %v507
    %512 = vst [vmem:[#allocation10] sm:$0xf] %v508
    %513 = vst [vmem:[#allocation10 + $0x4] sm:$0xf] %v509
    // Predicated region
    $region46: #{tpu_custom_call.1} parent=1 // pred_check
      _
    $region47: #{tpu_custom_call.1} parent=1 // pred_check_branch
      %515 = sbr.rel (0) target = $region49
    $region48: #{tpu_custom_call.1} parent=1 // pred_region
      %s517 = ssub.s32 128, 128
      %518 = vsyncadd [#allocation4], %s517
      %s519 = sshll.u32 [#allocation10], 4
      %s520 = int_to_ptr.vmem [resolvable:$true] %s519
      %525 = dma.vmem_to_hbm [thread:$0]  %s520, 128, %s7, [#allocation4], 64, 64, 4
    $region49: #{tpu_custom_call.1} parent=1 // pred_fallthru
      _
    // Predicated region
    $region50: #{tpu_custom_call.1} parent=1 // pred_check
      _
    $region51: #{tpu_custom_call.1} parent=1 // pred_check_branch
      %527 = sbr.rel (0) target = $region53
    $region52: #{tpu_custom_call.1} parent=1 // pred_region
      %528 = dma.done [#allocation4], 128
    $region53: #{tpu_custom_call.1} parent=1 // pred_fallthru
      _
    %529 = vsyncpa [#allocation3], 1
    %530 = vsyncpa [#allocation6], 1
    %531 = vsyncpa [#allocation9], 1
    %532 = vsyncpa [#allocation4], 1

</llo_original>
